<compile_context>
chip_gen: v5e
topology: v5e:2x2
jax: 0.10.0
libtpu: 0.0.40
codegen_flags: <defaults>
</compile_context>

<pallas_src>
import functools

import jax
import jax.numpy as jnp
from jax import lax
from jax.experimental import pallas as pl
from jax.experimental.pallas import tpu as pltpu

K = 7
PAD = 3
EPS = 1e-5
LANES = 128


def _round_up(x, m):
    return (x + m - 1) // m * m


def _spa_cnn_kernel(x_ref, t1_ref, b1_ref, t2_ref, b2_ref, out_ref,
                    pad1_ref, pad2_ref, *, H):
    """Fused conv1+BN+ReLU -> conv2+BN -> sigmoid -> gate, one batch element.

    All lane dims are already padded to multiples of 128 in the wrapper.

    x_ref  : (1, H, LX)   width-padded + lane-padded input slab
    t1_ref : (K*LX, LM)   stacked Toeplitz conv1 weights (BN folded); output
                          columns placed at the padded-width offsets
    b1_ref : (1, LM)      conv1+BN bias (zero in the pad columns)
    t2_ref : (K*LM, LX)   stacked Toeplitz conv2 weights (BN folded); output
                          columns match the input slab layout
    b2_ref : (1, LX)      conv2+BN bias (zero in the pad columns)
    out_ref: (1, H, LX)   gated output in the input slab layout
    pad1_ref / pad2_ref: (H+6, LX) / (H+6, LM) VMEM row-pad scratch
    """
    LX = x_ref.shape[-1]
    LM = t1_ref.shape[-1]

    xw = x_ref[0]                                          # (H, LX)

    # ---- conv1 (7x7, pad 3) + folded BN + ReLU -------------------------------
    # Zero only the 6 border rows; the interior is fully overwritten below.
    pad1_ref[pl.ds(0, PAD), :] = jnp.zeros((PAD, LX), pad1_ref.dtype)
    pad1_ref[pl.ds(H + PAD, PAD), :] = jnp.zeros((PAD, LX), pad1_ref.dtype)
    pad1_ref[pl.ds(PAD, H), :] = xw

    # im2row over ky: one long-K MXU matmul instead of 7 chained dots.
    rows1 = jnp.concatenate(
        [pad1_ref[pl.ds(ky, H), :] for ky in range(K)], axis=1)   # (H, K*LX)
    acc1 = jnp.dot(rows1, t1_ref[...], preferred_element_type=jnp.float32)
    h = jnp.maximum(acc1 + b1_ref[...], 0.0)               # (H, LM), f32
    # Width-pad / lane-pad columns of h are exactly zero (zero T1 columns, zero
    # bias, ReLU), so h is already the width-padded intermediate slab.

    # ---- conv2 (7x7, pad 3) + folded BN + sigmoid gate -----------------------
    pad2_ref[pl.ds(0, PAD), :] = jnp.zeros((PAD, LM), pad2_ref.dtype)
    pad2_ref[pl.ds(H + PAD, PAD), :] = jnp.zeros((PAD, LM), pad2_ref.dtype)
    pad2_ref[pl.ds(PAD, H), :] = h.astype(pad2_ref.dtype)

    rows2 = jnp.concatenate(
        [pad2_ref[pl.ds(ky, H), :] for ky in range(K)], axis=1)   # (H, K*LM)
    acc2 = jnp.dot(rows2, t2_ref[...], preferred_element_type=jnp.float32)
    att = jax.nn.sigmoid(acc2 + b2_ref[...])                # (H, LX)

    # Gate on the lane-aligned padded slab (pad columns of xw are zero); the
    # wrapper crops the valid columns after the call.
    out_ref[0] = (xw.astype(jnp.float32) * att).astype(out_ref.dtype)


def _build_toeplitz_stacked(w_eff, w_out, in_lanes, out_lanes, out_offset):
    """Fold a (7,7,Cin,Cout) kernel into a stacked banded matrix
    T : (K*in_lanes, out_lanes) such that for a width-padded slab
    rows[h, p*Cin+ci] (p in [0, w_out+6)):

      out[h, out_offset + x*Cout + co] =
          sum_{ky,kx,ci} rows[h+ky, (x+kx)*Cin+ci] * w_eff[ky,kx,ci,co]
    """
    k, _, cin, cout = w_eff.shape
    wp = w_out + k - 1
    wk = w_eff.reshape(k, k * cin, cout)                   # row index = kx*cin+ci
    cols = []
    for x in range(w_out):
        cols.append(jnp.pad(wk, ((0, 0),
                                 (x * cin, (wp - k - x) * cin),
                                 (0, 0))))
    t = jnp.stack(cols, axis=2)                            # (k, wp*cin, w_out, cout)
    t = t.reshape(k, wp * cin, w_out * cout)
    # Lane-pad the per-ky input rows and place the output columns at out_offset.
    t = jnp.pad(t, ((0, 0),
                    (0, in_lanes - wp * cin),
                    (out_offset, out_lanes - out_offset - w_out * cout)))
    return t.reshape(k * in_lanes, out_lanes)


def prepare_spa_cnn(params, width, compute_dtype=jnp.float32):
    """One-time (per weight update) prep: fold eval-mode BN into the conv
    weights and build the stacked, lane-padded Toeplitz matrices + biases.
    compute_dtype=jnp.bfloat16 recommended on v6e/v7x at scale."""
    (w1, b1, g1, be1, m1, v1, w2, b2, g2, be2, m2, v2) = params
    C, CM = w1.shape[2], w1.shape[3]
    PW = width + 2 * PAD
    LX = _round_up(PW * C, LANES)
    LM = _round_up(PW * CM, LANES)

    s1 = g1 / jnp.sqrt(v1 + EPS)
    w1e = w1 * s1
    bb1 = (b1 - m1) * s1 + be1
    s2 = g2 / jnp.sqrt(v2 + EPS)
    w2e = w2 * s2
    bb2 = (b2 - m2) * s2 + be2

    t1s = _build_toeplitz_stacked(w1e, width, LX, LM, PAD * CM).astype(compute_dtype)
    t2s = _build_toeplitz_stacked(w2e, width, LM, LX, PAD * C).astype(compute_dtype)
    b1p = jnp.pad(jnp.tile(bb1, width),
                  (PAD * CM, LM - PAD * CM - width * CM)).reshape(1, LM)
    b2p = jnp.pad(jnp.tile(bb2, width),
                  (PAD * C, LX - PAD * C - width * C)).reshape(1, LX)
    return (t1s, b1p.astype(jnp.float32), t2s, b2p.astype(jnp.float32))


@jax.jit
def spa_cnn_forward(x_nchw, prepared):
    """SpaCNN forward. x_nchw: (N, C, H, W) float32 -> (N, C, H, W)."""
    t1s, b1p, t2s, b2p = prepared
    N, C, H, W_ = x_nchw.shape
    PW = W_ + 2 * PAD
    LX = b2p.shape[-1]
    LM = b1p.shape[-1]
    compute_dtype = t1s.dtype

    # NCHW -> (N, H, LX): rows on sublanes, width-padded + lane-padded W*C on lanes.
    # TODO(synk): keep NHWC end-to-end in the surrounding model to drop this reformat.
    x_nhwc = jnp.transpose(x_nchw, (0, 2, 3, 1))
    x_wpad = jnp.pad(x_nhwc, ((0, 0), (0, 0), (PAD, PAD), (0, 0)))
    x_flat = x_wpad.reshape(N, H, PW * C)
    x_flat = jnp.pad(x_flat, ((0, 0), (0, 0), (0, LX - PW * C))).astype(compute_dtype)

    kern = functools.partial(_spa_cnn_kernel, H=H)
    y_flat = pl.pallas_call(
        kern,
        out_shape=jax.ShapeDtypeStruct((N, H, LX), jnp.float32),
        grid=(N,),
        in_specs=[
            pl.BlockSpec((1, H, LX), lambda n: (n, 0, 0)),
            pl.BlockSpec((K * LX, LM), lambda n: (0, 0)),
            pl.BlockSpec((1, LM), lambda n: (0, 0)),
            pl.BlockSpec((K * LM, LX), lambda n: (0, 0)),
            pl.BlockSpec((1, LX), lambda n: (0, 0)),
        ],
        out_specs=pl.BlockSpec((1, H, LX), lambda n: (n, 0, 0)),
        scratch_shapes=[
            pltpu.VMEM((H + 2 * PAD, LX), compute_dtype),
            pltpu.VMEM((H + 2 * PAD, LM), compute_dtype),
        ],
        compiler_params=pltpu.CompilerParams(
            dimension_semantics=("parallel",),
            vmem_limit_bytes=32 * 1024 * 1024),
    )(x_flat, t1s, b1p, t2s, b2p)

    # Crop the valid lane-aligned columns and restore NCHW.
    y = y_flat[:, :, PAD * C:PAD * C + W_ * C].reshape(N, H, W_, C)
    return jnp.transpose(y, (0, 3, 1, 2))


def _reference_forward(x_nchw, params):
    """Pure-JAX reference (lax conv) for correctness check."""
    (w1, b1, g1, be1, m1, v1, w2, b2, g2, be2, m2, v2) = params
    x = jnp.transpose(x_nchw, (0, 2, 3, 1))
    dn = ("NHWC", "HWIO", "NHWC")

    def bn(y, g, be, m, v):
        return (y - m) / jnp.sqrt(v + EPS) * g + be

    y = lax.conv_general_dilated(x, w1, (1, 1), "SAME",
                                 dimension_numbers=dn) + b1
    y = jnp.maximum(bn(y, g1, be1, m1, v1), 0.0)
    y = lax.conv_general_dilated(y, w2, (1, 1), "SAME",
                                 dimension_numbers=dn) + b2
    att = jax.nn.sigmoid(bn(y, g2, be2, m2, v2))
    return jnp.transpose(x * att, (0, 3, 1, 2))


if __name__ == "__main__":
    # SpaCNN(channels=4, channel_rate=1)  ->  mid_channels = 4
    N, C, H, W = 2, 4, 16, 16
    CM = C  # mid_channels

    key = jax.random.PRNGKey(0)
    ks = jax.random.split(key, 9)

    x = jax.random.normal(ks[0], (N, C, H, W), jnp.float32)

    # conv1: Conv2d(C, CM, 7, padding=3)       weights HWIO
    w1 = jax.random.normal(ks[1], (K, K, C, CM), jnp.float32) * 0.05
    b1 = jax.random.normal(ks[2], (CM,), jnp.float32) * 0.05
    # bn1: BatchNorm2d(CM) — deterministic synthetic running stats
    g1 = 1.0 + 0.1 * jax.random.normal(ks[3], (CM,), jnp.float32)
    be1 = 0.1 * jax.random.normal(ks[4], (CM,), jnp.float32)
    m1 = 0.05 * jax.random.normal(ks[5], (CM,), jnp.float32)
    v1 = jnp.abs(1.0 + 0.1 * jax.random.normal(ks[6], (CM,), jnp.float32))

    # conv2: Conv2d(CM, C, 7, padding=3)
    w2 = jax.random.normal(ks[7], (K, K, CM, C), jnp.float32) * 0.05
    b2 = jax.random.normal(ks[8], (C,), jnp.float32) * 0.05
    # bn2: BatchNorm2d(C)
    g2 = jnp.linspace(0.9, 1.1, C, dtype=jnp.float32)
    be2 = jnp.linspace(-0.05, 0.05, C, dtype=jnp.float32)
    m2 = jnp.linspace(-0.02, 0.02, C, dtype=jnp.float32)
    v2 = jnp.linspace(0.9, 1.1, C, dtype=jnp.float32)

    params = (w1, b1, g1, be1, m1, v1, w2, b2, g2, be2, m2, v2)

    # One-time weight prep (BN folding + Toeplitz build) hoisted out of the
    # per-call forward.
    prepared = prepare_spa_cnn(params, W, compute_dtype=jnp.float32)

    out = jax.block_until_ready(spa_cnn_forward(x, prepared))
    ref = jax.block_until_ready(_reference_forward(x, params))

    assert out.shape == (N, C, H, W)
    assert jnp.allclose(out, ref, atol=2e-4, rtol=2e-4), \
        f"max abs err {jnp.max(jnp.abs(out - ref))}"

    print("KERNEL_OK")
</pallas_src>

<mosaic_0001>
module attributes {stable_mosaic.version = 11 : i64} {
  func.func @_spa_cnn_kernel(%arg0: i32, %arg1: memref<1x16x128xf32, #tpu.memory_space<vmem>>, %arg2: memref<896x128xf32, #tpu.memory_space<vmem>>, %arg3: memref<1x128xf32, #tpu.memory_space<vmem>>, %arg4: memref<896x128xf32, #tpu.memory_space<vmem>>, %arg5: memref<1x128xf32, #tpu.memory_space<vmem>>, %arg6: memref<1x16x128xf32, #tpu.memory_space<vmem>>, %arg7: memref<22x128xf32, #tpu.memory_space<vmem>>, %arg8: memref<22x128xf32, #tpu.memory_space<vmem>>) attributes {dimension_semantics = [#tpu.dimension_semantics<parallel>], iteration_bounds = array<i64: 2>, scalar_prefetch = 0 : i64, scratch_operands = 2 : i64, tpu.core_type = #tpu.core_type<tc>, window_params = [{transform_indices = @transform_0, window_bounds = array<i64: 1, 16, 128>}, {pipeline_mode = #tpu.pipeline_mode<synchronous>, transform_indices = @transform_1, window_bounds = array<i64: 896, 128>}, {pipeline_mode = #tpu.pipeline_mode<synchronous>, transform_indices = @transform_2, window_bounds = array<i64: 1, 128>}, {pipeline_mode = #tpu.pipeline_mode<synchronous>, transform_indices = @transform_3, window_bounds = array<i64: 896, 128>}, {pipeline_mode = #tpu.pipeline_mode<synchronous>, transform_indices = @transform_4, window_bounds = array<i64: 1, 128>}, {transform_indices = @transform_5, window_bounds = array<i64: 1, 16, 128>}]} {
    %c0 = arith.constant 0 : index
    %c0_0 = arith.constant 0 : index
    %c0_1 = arith.constant 0 : index
    %0 = vector.load %arg1[%c0, %c0_0, %c0_1] : memref<1x16x128xf32, #tpu.memory_space<vmem>>, vector<1x16x128xf32>
    %1 = vector.shape_cast %0 : vector<1x16x128xf32> to vector<16x128xf32>
    %cst = arith.constant 0.000000e+00 : f32
    %2 = vector.broadcast %cst : f32 to vector<3x128xf32>
    %c0_2 = arith.constant 0 : index
    %c0_3 = arith.constant 0 : index
    %3 = vector.load %arg7[%c0_2, %c0_3] : memref<22x128xf32, #tpu.memory_space<vmem>>, vector<3x128xf32>
    tpu.vector_store %arg7[%c0_2, %c0_3], %2 {strides = array<i32>} : memref<22x128xf32, #tpu.memory_space<vmem>>, vector<3x128xf32>,
    %cst_4 = arith.constant 0.000000e+00 : f32
    %4 = vector.broadcast %cst_4 : f32 to vector<3x128xf32>
    %c19 = arith.constant 19 : index
    %c0_5 = arith.constant 0 : index
    %5 = vector.load %arg7[%c19, %c0_5] : memref<22x128xf32, #tpu.memory_space<vmem>>, vector<3x128xf32>
    tpu.vector_store %arg7[%c19, %c0_5], %4 {strides = array<i32>} : memref<22x128xf32, #tpu.memory_space<vmem>>, vector<3x128xf32>,
    %c3 = arith.constant 3 : index
    %c0_6 = arith.constant 0 : index
    %6 = vector.load %arg7[%c3, %c0_6] : memref<22x128xf32, #tpu.memory_space<vmem>>, vector<16x128xf32>
    tpu.vector_store %arg7[%c3, %c0_6], %1 {strides = array<i32>} : memref<22x128xf32, #tpu.memory_space<vmem>>, vector<16x128xf32>,
    %c0_7 = arith.constant 0 : index
    %c0_8 = arith.constant 0 : index
    %7 = vector.load %arg7[%c0_7, %c0_8] : memref<22x128xf32, #tpu.memory_space<vmem>>, vector<16x128xf32>
    %c1 = arith.constant 1 : index
    %c0_9 = arith.constant 0 : index
    %8 = vector.load %arg7[%c1, %c0_9] : memref<22x128xf32, #tpu.memory_space<vmem>>, vector<16x128xf32>
    %c2 = arith.constant 2 : index
    %c0_10 = arith.constant 0 : index
    %9 = vector.load %arg7[%c2, %c0_10] : memref<22x128xf32, #tpu.memory_space<vmem>>, vector<16x128xf32>
    %c3_11 = arith.constant 3 : index
    %c0_12 = arith.constant 0 : index
    %10 = vector.load %arg7[%c3_11, %c0_12] : memref<22x128xf32, #tpu.memory_space<vmem>>, vector<16x128xf32>
    %c4 = arith.constant 4 : index
    %c0_13 = arith.constant 0 : index
    %11 = vector.load %arg7[%c4, %c0_13] : memref<22x128xf32, #tpu.memory_space<vmem>>, vector<16x128xf32>
    %c5 = arith.constant 5 : index
    %c0_14 = arith.constant 0 : index
    %12 = vector.load %arg7[%c5, %c0_14] : memref<22x128xf32, #tpu.memory_space<vmem>>, vector<16x128xf32>
    %c6 = arith.constant 6 : index
    %c0_15 = arith.constant 0 : index
    %13 = vector.load %arg7[%c6, %c0_15] : memref<22x128xf32, #tpu.memory_space<vmem>>, vector<16x128xf32>
    %14 = tpu.concatenate %7, %8, %9, %10, %11, %12, %13 in 1 : vector<16x128xf32>, vector<16x128xf32>, vector<16x128xf32>, vector<16x128xf32>, vector<16x128xf32>, vector<16x128xf32>, vector<16x128xf32> -> vector<16x896xf32>
    %c0_16 = arith.constant 0 : index
    %c0_17 = arith.constant 0 : index
    %15 = vector.load %arg2[%c0_16, %c0_17] : memref<896x128xf32, #tpu.memory_space<vmem>>, vector<896x128xf32>
    %cst_18 = arith.constant dense<0.000000e+00> : vector<16x128xf32>
    %16 = tpu.matmul %14, %15, %cst_18 {dimension_numbers = #tpu.dot_dimension_numbers<[1], [0], [0], [1], [0, 0, 1, 1], [], []>} : vector<16x896xf32>, vector<896x128xf32>, vector<16x128xf32> -> vector<16x128xf32>
    %c0_19 = arith.constant 0 : index
    %c0_20 = arith.constant 0 : index
    %17 = vector.load %arg3[%c0_19, %c0_20] : memref<1x128xf32, #tpu.memory_space<vmem>>, vector<1x128xf32>
    %18 = vector.broadcast %17 : vector<1x128xf32> to vector<16x128xf32>
    %19 = arith.addf %16, %18 : vector<16x128xf32>
    %cst_21 = arith.constant 0.000000e+00 : f32
    %20 = vector.broadcast %cst_21 : f32 to vector<16x128xf32>
    %21 = arith.maximumf %19, %20 : vector<16x128xf32>
    %cst_22 = arith.constant 0.000000e+00 : f32
    %22 = vector.broadcast %cst_22 : f32 to vector<3x128xf32>
    %c0_23 = arith.constant 0 : index
    %c0_24 = arith.constant 0 : index
    %23 = vector.load %arg8[%c0_23, %c0_24] : memref<22x128xf32, #tpu.memory_space<vmem>>, vector<3x128xf32>
    tpu.vector_store %arg8[%c0_23, %c0_24], %22 {strides = array<i32>} : memref<22x128xf32, #tpu.memory_space<vmem>>, vector<3x128xf32>,
    %cst_25 = arith.constant 0.000000e+00 : f32
    %24 = vector.broadcast %cst_25 : f32 to vector<3x128xf32>
    %c19_26 = arith.constant 19 : index
    %c0_27 = arith.constant 0 : index
    %25 = vector.load %arg8[%c19_26, %c0_27] : memref<22x128xf32, #tpu.memory_space<vmem>>, vector<3x128xf32>
    tpu.vector_store %arg8[%c19_26, %c0_27], %24 {strides = array<i32>} : memref<22x128xf32, #tpu.memory_space<vmem>>, vector<3x128xf32>,
    %c3_28 = arith.constant 3 : index
    %c0_29 = arith.constant 0 : index
    %26 = vector.load %arg8[%c3_28, %c0_29] : memref<22x128xf32, #tpu.memory_space<vmem>>, vector<16x128xf32>
    tpu.vector_store %arg8[%c3_28, %c0_29], %21 {strides = array<i32>} : memref<22x128xf32, #tpu.memory_space<vmem>>, vector<16x128xf32>,
    %c0_30 = arith.constant 0 : index
    %c0_31 = arith.constant 0 : index
    %27 = vector.load %arg8[%c0_30, %c0_31] : memref<22x128xf32, #tpu.memory_space<vmem>>, vector<16x128xf32>
    %c1_32 = arith.constant 1 : index
    %c0_33 = arith.constant 0 : index
    %28 = vector.load %arg8[%c1_32, %c0_33] : memref<22x128xf32, #tpu.memory_space<vmem>>, vector<16x128xf32>
    %c2_34 = arith.constant 2 : index
    %c0_35 = arith.constant 0 : index
    %29 = vector.load %arg8[%c2_34, %c0_35] : memref<22x128xf32, #tpu.memory_space<vmem>>, vector<16x128xf32>
    %c3_36 = arith.constant 3 : index
    %c0_37 = arith.constant 0 : index
    %30 = vector.load %arg8[%c3_36, %c0_37] : memref<22x128xf32, #tpu.memory_space<vmem>>, vector<16x128xf32>
    %c4_38 = arith.constant 4 : index
    %c0_39 = arith.constant 0 : index
    %31 = vector.load %arg8[%c4_38, %c0_39] : memref<22x128xf32, #tpu.memory_space<vmem>>, vector<16x128xf32>
    %c5_40 = arith.constant 5 : index
    %c0_41 = arith.constant 0 : index
    %32 = vector.load %arg8[%c5_40, %c0_41] : memref<22x128xf32, #tpu.memory_space<vmem>>, vector<16x128xf32>
    %c6_42 = arith.constant 6 : index
    %c0_43 = arith.constant 0 : index
    %33 = vector.load %arg8[%c6_42, %c0_43] : memref<22x128xf32, #tpu.memory_space<vmem>>, vector<16x128xf32>
    %34 = tpu.concatenate %27, %28, %29, %30, %31, %32, %33 in 1 : vector<16x128xf32>, vector<16x128xf32>, vector<16x128xf32>, vector<16x128xf32>, vector<16x128xf32>, vector<16x128xf32>, vector<16x128xf32> -> vector<16x896xf32>
    %c0_44 = arith.constant 0 : index
    %c0_45 = arith.constant 0 : index
    %35 = vector.load %arg4[%c0_44, %c0_45] : memref<896x128xf32, #tpu.memory_space<vmem>>, vector<896x128xf32>
    %cst_46 = arith.constant dense<0.000000e+00> : vector<16x128xf32>
    %36 = tpu.matmul %34, %35, %cst_46 {dimension_numbers = #tpu.dot_dimension_numbers<[1], [0], [0], [1], [0, 0, 1, 1], [], []>} : vector<16x896xf32>, vector<896x128xf32>, vector<16x128xf32> -> vector<16x128xf32>
    %c0_47 = arith.constant 0 : index
    %c0_48 = arith.constant 0 : index
    %37 = vector.load %arg5[%c0_47, %c0_48] : memref<1x128xf32, #tpu.memory_space<vmem>>, vector<1x128xf32>
    %38 = vector.broadcast %37 : vector<1x128xf32> to vector<16x128xf32>
    %39 = arith.addf %36, %38 : vector<16x128xf32>
    %40 = arith.negf %39 : vector<16x128xf32>
    %41 = math.exp %40 : vector<16x128xf32>
    %cst_49 = arith.constant 1.000000e+00 : f32
    %42 = vector.broadcast %cst_49 : f32 to vector<16x128xf32>
    %43 = arith.addf %42, %41 : vector<16x128xf32>
    %44 = arith.divf %42, %43 : vector<16x128xf32>
    %45 = arith.mulf %1, %44 : vector<16x128xf32>
    %c0_50 = arith.constant 0 : index
    %c0_51 = arith.constant 0 : index
    %c0_52 = arith.constant 0 : index
    %46 = vector.load %arg6[%c0_50, %c0_51, %c0_52] : memref<1x16x128xf32, #tpu.memory_space<vmem>>, vector<1x16x128xf32>
    %47 = vector.shape_cast %46 : vector<1x16x128xf32> to vector<16x128xf32>
    %48 = vector.shape_cast %45 : vector<16x128xf32> to vector<1x16x128xf32>
    tpu.vector_store %arg6[%c0_50, %c0_51, %c0_52], %48 {strides = array<i32>} : memref<1x16x128xf32, #tpu.memory_space<vmem>>, vector<1x16x128xf32>,
    return
  }
  func.func @transform_0(%arg0: i32) -> (i32, i32, i32) {
    %c0_i32 = arith.constant 0 : i32
    %c0_i32_0 = arith.constant 0 : i32
    %c0_i32_1 = arith.constant 0 : i32
    return %arg0, %c0_i32, %c0_i32_0 : i32, i32, i32
  }
  func.func @transform_1(%arg0: i32) -> (i32, i32) {
    %c0_i32 = arith.constant 0 : i32
    %c0_i32_0 = arith.constant 0 : i32
    %c0_i32_1 = arith.constant 0 : i32
    return %c0_i32, %c0_i32_0 : i32, i32
  }
  func.func @transform_2(%arg0: i32) -> (i32, i32) {
    %c0_i32 = arith.constant 0 : i32
    %c0_i32_0 = arith.constant 0 : i32
    %c0_i32_1 = arith.constant 0 : i32
    return %c0_i32, %c0_i32_0 : i32, i32
  }
  func.func @transform_3(%arg0: i32) -> (i32, i32) {
    %c0_i32 = arith.constant 0 : i32
    %c0_i32_0 = arith.constant 0 : i32
    %c0_i32_1 = arith.constant 0 : i32
    return %c0_i32, %c0_i32_0 : i32, i32
  }
  func.func @transform_4(%arg0: i32) -> (i32, i32) {
    %c0_i32 = arith.constant 0 : i32
    %c0_i32_0 = arith.constant 0 : i32
    %c0_i32_1 = arith.constant 0 : i32
    return %c0_i32, %c0_i32_0 : i32, i32
  }
  func.func @transform_5(%arg0: i32) -> (i32, i32, i32) {
    %c0_i32 = arith.constant 0 : i32
    %c0_i32_0 = arith.constant 0 : i32
    %c0_i32_1 = arith.constant 0 : i32
    return %arg0, %c0_i32, %c0_i32_0 : i32, i32, i32
  }
}

</mosaic_0001>

<llo_original>
// kernel: spa_cnn_forward.1
$region0: #{spa_cnn_forward.1}
  #allocation0 [shape = 'u32[]', space=smem, size = 0x4, offset = 0x4, fixed_abs, tag = 'smem constant byte address 0x4 - core index']
  #allocation1 [shape = 'u32[72,128]{1,0:T(1,128)}', space=vmem, size = 0x9000, scoped, tag = 'internal scratch']
  #allocation2 [shape = 'f32[22,128]{1,0:T(8,128)}', space=vmem, size = 0x3000, scoped, tag = 'scratch operand']
  #allocation3 [shape = 'f32[22,128]{1,0:T(8,128)}', space=vmem, size = 0x3000, scoped, tag = 'scratch operand']
  %s0 = inlined_call_operand.vmem [shape: f32[2,16,128], index: 0, kind: input, shape index: {}]
  %s1 = inlined_call_operand.hbm [shape: f32[896,128], index: 1, kind: input, shape index: {}]
  %s2 = inlined_call_operand.vmem [shape: f32[1,128], index: 2, kind: input, shape index: {}]
  %s3 = inlined_call_operand.hbm [shape: f32[896,128], index: 3, kind: input, shape index: {}]
  %s4 = inlined_call_operand.vmem [shape: f32[1,128], index: 4, kind: input, shape index: {}]
  %s5 = inlined_call_operand.vmem [shape: f32[2,16,128], index: 5, kind: output, shape index: {}]
  %s6 = sld [smem:[#allocation0]]
  $region61: #{spa_cnn_forward.1} parent=0
    _
  %s8 = ssub.s32 1, %s6
  %s9 = scalar_select 0, %s8, %s6
  $region1: #{spa_cnn_forward.1} parent=0
    #allocation4 [shape = 'u8[458752]{0}', space=vmem, size = 0x70000, scoped, tag = 'input window, operand 1, single buffered']
    #allocation5 [shape = 's32[2]{0}', space=sflag, size = 0x8, scoped, tag = 'scoped memory for spa_cnn_forward.1']
    #allocation6 [shape = 'u8[458752]{0}', space=vmem, size = 0x70000, scoped, tag = 'input window, operand 3, single buffered']
    #allocation7 [shape = 's32[1]{0}', space=sflag, size = 0x4, scoped, tag = 'scoped memory for spa_cnn_forward.1']
    %10 = vsyncpa [#allocation5], 0
    %11 = vsyncpa [#allocation7], 0
    loop: start=0, step=1, limit=4
    $region2: #{spa_cnn_forward.1} parent=1 // loop_pre_header
      _
    $region3: #{spa_cnn_forward.1} parent=1 // loop_header
      %s13 = sphi 0, %s17
      %p14 = scmp.ge.s32.totalorder %s13, 4
      %s23 = sphi 0, %s25
      %s26 = sphi 0, %s23
      %s27 = sphi 0, %s26
      %s43 = sphi 0, %s27
      %s47 = sphi 0, %s47
      %s49 = sphi 0, %s47
      %s50 = sphi 0, %s49
      %s64 = sphi 0, %s50
      %s68 = sphi 0, %s68
      %s70 = sphi 0, %s68
      %s71 = sphi 0, %s70
      %s85 = sphi 0, %s71
      %s89 = sphi 0, %s89
      %s91 = sphi 0, %s89
      %s92 = sphi 0, %s91
      %s106 = sphi 0, %s92
      %s110 = sphi 0, %s110
      %s112 = sphi 0, %s110
      %s113 = sphi 0, %s112
      %s127 = sphi 0, %s113
      %s133 = sphi 0, %s135
      %s136 = sphi 0, %s133
      %s137 = sphi 0, %s136
      %s153 = sphi 0, %s137
    $region4: #{spa_cnn_forward.1} parent=1 // loop_header_branch
      %16 = sbr.rel (%p14) target = $region8
    $region5: #{spa_cnn_forward.1} parent=1 // loop_body
      %s18 = ssub.s32 %s13, 1
      %s19 = ssub.s32 %s13, 2
      %s20 = sadd.s32 %s13, 1
      %s21 = ssub.s32 %s13, %s20
      %p22 = scmp.eq.s32.totalorder %s21, 0
      %s24 = sadd.s32 %s23, 1
      %s25 = scalar_select %p22, %s23, %s24
      %p28 = pneg %p22
      %p29 = scmp.eq.s32.totalorder %s13, 1
      %p30 = por %p28, %p29
      %p31 = scmp.ne.s32.totalorder %s23, %s26
      %p32 = scmp.eq.s32.totalorder %s13, 0
      %p33 = por %p31, %p32
      %p34 = scmp.ne.s32.totalorder %s23, %s26
      %p35 = scmp.eq.s32.totalorder %s18, 1
      %p36 = por %p34, %p35
      %p37 = scmp.ne.s32.totalorder %s26, %s27
      %p38 = scmp.eq.s32.totalorder %s18, 0
      %p39 = por %p37, %p38
      %p40 = scmp.ne.s32.totalorder %s26, %s27
      %p41 = scmp.eq.s32.totalorder %s19, 1
      %p42 = por %p40, %p41
      %p44 = scmp.ne.s32.totalorder %s27, %s43
      %p45 = scmp.eq.s32.totalorder %s19, 0
      %p46 = por %p44, %p45
      %s48 = sadd.s32 %s47, 1
      %p51 = scmp.eq.s32.totalorder %s13, 1
      %p52 = scmp.ne.s32.totalorder %s47, %s49
      %p53 = scmp.eq.s32.totalorder %s13, 0
      %p54 = por %p52, %p53
      %p55 = scmp.ne.s32.totalorder %s47, %s49
      %p56 = scmp.eq.s32.totalorder %s18, 1
      %p57 = por %p55, %p56
      %p58 = scmp.ne.s32.totalorder %s49, %s50
      %p59 = scmp.eq.s32.totalorder %s18, 0
      %p60 = por %p58, %p59
      %p61 = scmp.ne.s32.totalorder %s49, %s50
      %p62 = scmp.eq.s32.totalorder %s19, 1
      %p63 = por %p61, %p62
      %p65 = scmp.ne.s32.totalorder %s50, %s64
      %p66 = scmp.eq.s32.totalorder %s19, 0
      %p67 = por %p65, %p66
      %s69 = sadd.s32 %s68, 1
      %p72 = scmp.eq.s32.totalorder %s13, 1
      %p73 = scmp.ne.s32.totalorder %s68, %s70
      %p74 = scmp.eq.s32.totalorder %s13, 0
      %p75 = por %p73, %p74
      %p76 = scmp.ne.s32.totalorder %s68, %s70
      %p77 = scmp.eq.s32.totalorder %s18, 1
      %p78 = por %p76, %p77
      %p79 = scmp.ne.s32.totalorder %s70, %s71
      %p80 = scmp.eq.s32.totalorder %s18, 0
      %p81 = por %p79, %p80
      %p82 = scmp.ne.s32.totalorder %s70, %s71
      %p83 = scmp.eq.s32.totalorder %s19, 1
      %p84 = por %p82, %p83
      %p86 = scmp.ne.s32.totalorder %s71, %s85
      %p87 = scmp.eq.s32.totalorder %s19, 0
      %p88 = por %p86, %p87
      %s90 = sadd.s32 %s89, 1
      %p93 = scmp.eq.s32.totalorder %s13, 1
      %p94 = scmp.ne.s32.totalorder %s89, %s91
      %p95 = scmp.eq.s32.totalorder %s13, 0
      %p96 = por %p94, %p95
      %p97 = scmp.ne.s32.totalorder %s89, %s91
      %p98 = scmp.eq.s32.totalorder %s18, 1
      %p99 = por %p97, %p98
      %p100 = scmp.ne.s32.totalorder %s91, %s92
      %p101 = scmp.eq.s32.totalorder %s18, 0
      %p102 = por %p100, %p101
      %p103 = scmp.ne.s32.totalorder %s91, %s92
      %p104 = scmp.eq.s32.totalorder %s19, 1
      %p105 = por %p103, %p104
      %p107 = scmp.ne.s32.totalorder %s92, %s106
      %p108 = scmp.eq.s32.totalorder %s19, 0
      %p109 = por %p107, %p108
      %s111 = sadd.s32 %s110, 1
      %p114 = scmp.eq.s32.totalorder %s13, 1
      %p115 = scmp.ne.s32.totalorder %s110, %s112
      %p116 = scmp.eq.s32.totalorder %s13, 0
      %p117 = por %p115, %p116
      %p118 = scmp.ne.s32.totalorder %s110, %s112
      %p119 = scmp.eq.s32.totalorder %s18, 1
      %p120 = por %p118, %p119
      %p121 = scmp.ne.s32.totalorder %s112, %s113
      %p122 = scmp.eq.s32.totalorder %s18, 0
      %p123 = por %p121, %p122
      %p124 = scmp.ne.s32.totalorder %s112, %s113
      %p125 = scmp.eq.s32.totalorder %s19, 1
      %p126 = por %p124, %p125
      %p128 = scmp.ne.s32.totalorder %s113, %s127
      %p129 = scmp.eq.s32.totalorder %s19, 0
      %p130 = por %p128, %p129
      %s131 = ssub.s32 %s13, %s20
      %p132 = scmp.eq.s32.totalorder %s131, 0
      %s134 = sadd.s32 %s133, 1
      %s135 = scalar_select %p132, %s133, %s134
      %p138 = pneg %p132
      %p139 = scmp.eq.s32.totalorder %s13, 1
      %p140 = por %p138, %p139
      %p141 = scmp.ne.s32.totalorder %s133, %s136
      %p142 = scmp.eq.s32.totalorder %s13, 0
      %p143 = por %p141, %p142
      %p144 = scmp.ne.s32.totalorder %s133, %s136
      %p145 = scmp.eq.s32.totalorder %s18, 1
      %p146 = por %p144, %p145
      %p147 = scmp.ne.s32.totalorder %s136, %s137
      %p148 = scmp.eq.s32.totalorder %s18, 0
      %p149 = por %p147, %p148
      %p150 = scmp.ne.s32.totalorder %s136, %s137
      %p151 = scmp.eq.s32.totalorder %s19, 1
      %p152 = por %p150, %p151
      %p154 = scmp.ne.s32.totalorder %s137, %s153
      %p155 = scmp.eq.s32.totalorder %s19, 0
      %p156 = por %p154, %p155
      %p157 = scmp.le.s32.totalorder 1, %s13
      %p158 = scmp.lt.s32.totalorder %s13, 3
      %p159 = pnand %p157, %p158
      %p160 = pneg %p159
      // Predicated region
      $region9: #{spa_cnn_forward.1} parent=5 // pred_check
        _
      $region10: #{spa_cnn_forward.1} parent=5 // pred_check_branch
        %162 = sbr.rel (%p159) target = $region12
      $region11: #{spa_cnn_forward.1} parent=5 // pred_region
        %s163 = ssub.s32 %s13, 1
        // Predicated region
        $region13: #{spa_cnn_forward.1} parent=11 // pred_check
          %p164 = pneg %p60
        $region14: #{spa_cnn_forward.1} parent=11 // pred_check_branch
          %166 = sbr.rel (%p164) target = $region16
        $region15: #{spa_cnn_forward.1} parent=11 // pred_region
          %168 = vsyncadd [#allocation5], 0
          %s169 = sshll.u32 %s1, 4
          %s170 = int_to_ptr.hbm [resolvable:$true] %s169
          %s171 = sshll.u32 [#allocation4], 4
          %s172 = int_to_ptr.vmem [resolvable:$true] %s171
          %177 = dma.hbm_to_vmem [thread:$0]  %s170, 14336, %s172, [#allocation5], 128, 128, 8
        $region16: #{spa_cnn_forward.1} parent=11 // pred_fallthru
          _
        // Predicated region
        $region17: #{spa_cnn_forward.1} parent=11 // pred_check
          %p178 = pneg %p81
        $region18: #{spa_cnn_forward.1} parent=11 // pred_check_branch
          %180 = sbr.rel (%p178) target = $region20
        $region19: #{spa_cnn_forward.1} parent=11 // pred_region
          _
        $region20: #{spa_cnn_forward.1} parent=11 // pred_fallthru
          _
        // Predicated region
        $region21: #{spa_cnn_forward.1} parent=11 // pred_check
          %p181 = pneg %p102
        $region22: #{spa_cnn_forward.1} parent=11 // pred_check_branch
          %183 = sbr.rel (%p181) target = $region24
        $region23: #{spa_cnn_forward.1} parent=11 // pred_region
          %185 = vsyncadd [#allocation7], 0
          %s186 = sshll.u32 %s3, 4
          %s187 = int_to_ptr.hbm [resolvable:$true] %s186
          %s188 = sshll.u32 [#allocation6], 4
          %s189 = int_to_ptr.vmem [resolvable:$true] %s188
          %194 = dma.hbm_to_vmem [thread:$0]  %s187, 14336, %s189, [#allocation7], 128, 128, 8
        $region24: #{spa_cnn_forward.1} parent=11 // pred_fallthru
          _
        // Predicated region
        $region25: #{spa_cnn_forward.1} parent=11 // pred_check
          %p195 = pneg %p123
        $region26: #{spa_cnn_forward.1} parent=11 // pred_check_branch
          %197 = sbr.rel (%p195) target = $region28
        $region27: #{spa_cnn_forward.1} parent=11 // pred_region
          _
        $region28: #{spa_cnn_forward.1} parent=11 // pred_fallthru
          _
      $region12: #{spa_cnn_forward.1} parent=5 // pred_fallthru
        _
      %p198 = scmp.lt.s32.totalorder %s13, 2
      // Predicated region
      $region29: #{spa_cnn_forward.1} parent=5 // pred_check
        %p199 = pneg %p198
      $region30: #{spa_cnn_forward.1} parent=5 // pred_check_branch
        %201 = sbr.rel (%p199) target = $region32
      $region31: #{spa_cnn_forward.1} parent=5 // pred_region
        // Predicated region
        $region33: #{spa_cnn_forward.1} parent=31 // pred_check
          %p202 = pneg %p33
        $region34: #{spa_cnn_forward.1} parent=31 // pred_check_branch
          %204 = sbr.rel (%p202) target = $region36
        $region35: #{spa_cnn_forward.1} parent=31 // pred_region
          %p205 = scmp.lt.s32.totalorder %s13, 1
          %s206 = scalar_select %p205, %s13, 1
          %s207 = smul.addr %s206, 2
          %s208 = smul.addr %s207, 8
          %s209 = scalar_lea.vmem %s0, %s208
        $region36: #{spa_cnn_forward.1} parent=31 // pred_fallthru
          _
      $region32: #{spa_cnn_forward.1} parent=5 // pred_fallthru
        _
      %p210 = scmp.le.s32.totalorder 1, %s13
      %p211 = scmp.lt.s32.totalorder %s13, 3
      %p212 = pnand %p210, %p211
      %p213 = pneg %p212
      // Predicated region
      $region37: #{spa_cnn_forward.1} parent=5 // pred_check
        _
      $region38: #{spa_cnn_forward.1} parent=5 // pred_check_branch
        %215 = sbr.rel (%p212) target = $region40
      $region39: #{spa_cnn_forward.1} parent=5 // pred_region
        %s216 = ssub.s32 %s13, 1
        // Predicated region
        $region41: #{spa_cnn_forward.1} parent=39 // pred_check
          %p217 = pneg %p60
        $region42: #{spa_cnn_forward.1} parent=39 // pred_check_branch
          %219 = sbr.rel (%p217) target = $region44
        $region43: #{spa_cnn_forward.1} parent=39 // pred_region
          %221 = dma.done [#allocation5], 14336
        $region44: #{spa_cnn_forward.1} parent=39 // pred_fallthru
          _
        // Predicated region
        $region45: #{spa_cnn_forward.1} parent=39 // pred_check
          %p222 = pneg %p102
        $region46: #{spa_cnn_forward.1} parent=39 // pred_check_branch
          %224 = sbr.rel (%p222) target = $region48
        $region47: #{spa_cnn_forward.1} parent=39 // pred_region
          %226 = dma.done [#allocation7], 14336
        $region48: #{spa_cnn_forward.1} parent=39 // pred_fallthru
          _
        %p227 = scmp.lt.s32.totalorder %s18, 1
        %s228 = scalar_select %p227, %s18, 1
        %s229 = smul.addr %s228, 2
        %s230 = smul.addr %s229, 8
        %s231 = scalar_lea.vmem %s0, %s230
        %p232 = pneg %p39
        %p233 = pneg %p36
        %p234 = pneg %p60
        %p235 = pneg %p57
        %p236 = pneg %p81
        %p237 = pneg %p78
        %p238 = pneg %p102
        %p239 = pneg %p99
        %p240 = pneg %p123
        %p241 = pneg %p120
        %p242 = pneg %p149
        %p243 = pneg %p146
        %p244 = scmp.lt.s32.totalorder %s18, 1
        %s245 = scalar_select %p244, %s18, 1
        %s246 = smul.addr %s245, 2
        %s247 = smul.addr %s246, 8
        %s248 = scalar_lea.vmem %s5, %s247
        %p249 = scmp.lt.s32.totalorder %s18, 1
        %s250 = scalar_select %p249, %s18, 1
        %s251 = smul.addr %s250, 2
        %s252 = smul.addr %s251, 8
        %s253 = scalar_lea.vmem %s0, %s252
        %p254 = scmp.lt.s32.totalorder %s18, 1
        %s255 = scalar_select %p254, %s18, 1
        %s256 = smul.addr %s255, 2
        %s257 = smul.addr %s256, 8
        %s258 = scalar_lea.vmem %s5, %s257
        %v259 = vld [vmem:[%s253] sm:$0xff]
        %v260 = vld [vmem:[%s253 + $0x8] sm:$0xff]
        %261 = vst [vmem:[#allocation2] sm:$0x7] 0.0
        %262 = vst [vmem:[#allocation2 + $0x13] sm:$0x7] 0.0
        %263 = vst [vmem:[#allocation2 + $0x3] sm:$0xff] %v259
        %264 = vst [vmem:[#allocation2 + $0xb] sm:$0xff] %v260
        %v265 = vld [vmem:[#allocation2] sm:$0xff]
        %v266 = vld [vmem:[#allocation2 + $0x8] sm:$0xff]
        %v267 = vld [vmem:[#allocation2 + $0x1] sm:$0xff]
        %v268 = vld [vmem:[#allocation2 + $0x9] sm:$0xff]
        %v269 = vld [vmem:[#allocation2 + $0x2] sm:$0xff]
        %v270 = vld [vmem:[#allocation2 + $0xa] sm:$0xff]
        %v271 = vld [vmem:[#allocation2 + $0x3] sm:$0xff]
        %v272 = vld [vmem:[#allocation2 + $0xb] sm:$0xff]
        %v273 = vld [vmem:[#allocation2 + $0x4] sm:$0xff]
        %v274 = vld [vmem:[#allocation2 + $0xc] sm:$0xff]
        %v275 = vld [vmem:[#allocation2 + $0x5] sm:$0xff]
        %v276 = vld [vmem:[#allocation2 + $0xd] sm:$0xff]
        %v277 = vld [vmem:[#allocation2 + $0x6] sm:$0xff]
        %v278 = vld [vmem:[#allocation2 + $0xe] sm:$0xff]
        %v279 = vld [vmem:[#allocation4] sm:$0xff]
        %v280 = vld [vmem:[#allocation4 + $0x8] sm:$0xff]
        %v281 = vld [vmem:[#allocation4 + $0x10] sm:$0xff]
        %v282 = vld [vmem:[#allocation4 + $0x18] sm:$0xff]
        %v283 = vld [vmem:[#allocation4 + $0x20] sm:$0xff]
        %v284 = vld [vmem:[#allocation4 + $0x28] sm:$0xff]
        %v285 = vld [vmem:[#allocation4 + $0x30] sm:$0xff]
        %v286 = vld [vmem:[#allocation4 + $0x38] sm:$0xff]
        %v287 = vld [vmem:[#allocation4 + $0x40] sm:$0xff]
        %v288 = vld [vmem:[#allocation4 + $0x48] sm:$0xff]
        %v289 = vld [vmem:[#allocation4 + $0x50] sm:$0xff]
        %v290 = vld [vmem:[#allocation4 + $0x58] sm:$0xff]
        %v291 = vld [vmem:[#allocation4 + $0x60] sm:$0xff]
        %v292 = vld [vmem:[#allocation4 + $0x68] sm:$0xff]
        %v293 = vld [vmem:[#allocation4 + $0x70] sm:$0xff]
        %v294 = vld [vmem:[#allocation4 + $0x78] sm:$0xff]
        %v295 = vld [vmem:[#allocation4 + $0x80] sm:$0xff]
        %v296 = vld [vmem:[#allocation4 + $0x88] sm:$0xff]
        %v297 = vld [vmem:[#allocation4 + $0x90] sm:$0xff]
        %v298 = vld [vmem:[#allocation4 + $0x98] sm:$0xff]
        %v299 = vld [vmem:[#allocation4 + $0xa0] sm:$0xff]
        %v300 = vld [vmem:[#allocation4 + $0xa8] sm:$0xff]
        %v301 = vld [vmem:[#allocation4 + $0xb0] sm:$0xff]
        %v302 = vld [vmem:[#allocation4 + $0xb8] sm:$0xff]
        %v303 = vld [vmem:[#allocation4 + $0xc0] sm:$0xff]
        %v304 = vld [vmem:[#allocation4 + $0xc8] sm:$0xff]
        %v305 = vld [vmem:[#allocation4 + $0xd0] sm:$0xff]
        %v306 = vld [vmem:[#allocation4 + $0xd8] sm:$0xff]
        %v307 = vld [vmem:[#allocation4 + $0xe0] sm:$0xff]
        %v308 = vld [vmem:[#allocation4 + $0xe8] sm:$0xff]
        %v309 = vld [vmem:[#allocation4 + $0xf0] sm:$0xff]
        %v310 = vld [vmem:[#allocation4 + $0xf8] sm:$0xff]
        %v311 = vld [vmem:[#allocation4 + $0x100] sm:$0xff]
        %v312 = vld [vmem:[#allocation4 + $0x108] sm:$0xff]
        %v313 = vld [vmem:[#allocation4 + $0x110] sm:$0xff]
        %v314 = vld [vmem:[#allocation4 + $0x118] sm:$0xff]
        %v315 = vld [vmem:[#allocation4 + $0x120] sm:$0xff]
        %v316 = vld [vmem:[#allocation4 + $0x128] sm:$0xff]
        %v317 = vld [vmem:[#allocation4 + $0x130] sm:$0xff]
        %v318 = vld [vmem:[#allocation4 + $0x138] sm:$0xff]
        %v319 = vld [vmem:[#allocation4 + $0x140] sm:$0xff]
        %v320 = vld [vmem:[#allocation4 + $0x148] sm:$0xff]
        %v321 = vld [vmem:[#allocation4 + $0x150] sm:$0xff]
        %v322 = vld [vmem:[#allocation4 + $0x158] sm:$0xff]
        %v323 = vld [vmem:[#allocation4 + $0x160] sm:$0xff]
        %v324 = vld [vmem:[#allocation4 + $0x168] sm:$0xff]
        %v325 = vld [vmem:[#allocation4 + $0x170] sm:$0xff]
        %v326 = vld [vmem:[#allocation4 + $0x178] sm:$0xff]
        %v327 = vld [vmem:[#allocation4 + $0x180] sm:$0xff]
        %v328 = vld [vmem:[#allocation4 + $0x188] sm:$0xff]
        %v329 = vld [vmem:[#allocation4 + $0x190] sm:$0xff]
        %v330 = vld [vmem:[#allocation4 + $0x198] sm:$0xff]
        %v331 = vld [vmem:[#allocation4 + $0x1a0] sm:$0xff]
        %v332 = vld [vmem:[#allocation4 + $0x1a8] sm:$0xff]
        %v333 = vld [vmem:[#allocation4 + $0x1b0] sm:$0xff]
        %v334 = vld [vmem:[#allocation4 + $0x1b8] sm:$0xff]
        %v335 = vld [vmem:[#allocation4 + $0x1c0] sm:$0xff]
        %v336 = vld [vmem:[#allocation4 + $0x1c8] sm:$0xff]
        %v337 = vld [vmem:[#allocation4 + $0x1d0] sm:$0xff]
        %v338 = vld [vmem:[#allocation4 + $0x1d8] sm:$0xff]
        %v339 = vld [vmem:[#allocation4 + $0x1e0] sm:$0xff]
        %v340 = vld [vmem:[#allocation4 + $0x1e8] sm:$0xff]
        %v341 = vld [vmem:[#allocation4 + $0x1f0] sm:$0xff]
        %v342 = vld [vmem:[#allocation4 + $0x1f8] sm:$0xff]
        %v343 = vld [vmem:[#allocation4 + $0x200] sm:$0xff]
        %v344 = vld [vmem:[#allocation4 + $0x208] sm:$0xff]
        %v345 = vld [vmem:[#allocation4 + $0x210] sm:$0xff]
        %v346 = vld [vmem:[#allocation4 + $0x218] sm:$0xff]
        %v347 = vld [vmem:[#allocation4 + $0x220] sm:$0xff]
        %v348 = vld [vmem:[#allocation4 + $0x228] sm:$0xff]
        %v349 = vld [vmem:[#allocation4 + $0x230] sm:$0xff]
        %v350 = vld [vmem:[#allocation4 + $0x238] sm:$0xff]
        %v351 = vld [vmem:[#allocation4 + $0x240] sm:$0xff]
        %v352 = vld [vmem:[#allocation4 + $0x248] sm:$0xff]
        %v353 = vld [vmem:[#allocation4 + $0x250] sm:$0xff]
        %v354 = vld [vmem:[#allocation4 + $0x258] sm:$0xff]
        %v355 = vld [vmem:[#allocation4 + $0x260] sm:$0xff]
        %v356 = vld [vmem:[#allocation4 + $0x268] sm:$0xff]
        %v357 = vld [vmem:[#allocation4 + $0x270] sm:$0xff]
        %v358 = vld [vmem:[#allocation4 + $0x278] sm:$0xff]
        %v359 = vld [vmem:[#allocation4 + $0x280] sm:$0xff]
        %v360 = vld [vmem:[#allocation4 + $0x288] sm:$0xff]
        %v361 = vld [vmem:[#allocation4 + $0x290] sm:$0xff]
        %v362 = vld [vmem:[#allocation4 + $0x298] sm:$0xff]
        %v363 = vld [vmem:[#allocation4 + $0x2a0] sm:$0xff]
        %v364 = vld [vmem:[#allocation4 + $0x2a8] sm:$0xff]
        %v365 = vld [vmem:[#allocation4 + $0x2b0] sm:$0xff]
        %v366 = vld [vmem:[#allocation4 + $0x2b8] sm:$0xff]
        %v367 = vld [vmem:[#allocation4 + $0x2c0] sm:$0xff]
        %v368 = vld [vmem:[#allocation4 + $0x2c8] sm:$0xff]
        %v369 = vld [vmem:[#allocation4 + $0x2d0] sm:$0xff]
        %v370 = vld [vmem:[#allocation4 + $0x2d8] sm:$0xff]
        %v371 = vld [vmem:[#allocation4 + $0x2e0] sm:$0xff]
        %v372 = vld [vmem:[#allocation4 + $0x2e8] sm:$0xff]
        %v373 = vld [vmem:[#allocation4 + $0x2f0] sm:$0xff]
        %v374 = vld [vmem:[#allocation4 + $0x2f8] sm:$0xff]
        %v375 = vld [vmem:[#allocation4 + $0x300] sm:$0xff]
        %v376 = vld [vmem:[#allocation4 + $0x308] sm:$0xff]
        %v377 = vld [vmem:[#allocation4 + $0x310] sm:$0xff]
        %v378 = vld [vmem:[#allocation4 + $0x318] sm:$0xff]
        %v379 = vld [vmem:[#allocation4 + $0x320] sm:$0xff]
        %v380 = vld [vmem:[#allocation4 + $0x328] sm:$0xff]
        %v381 = vld [vmem:[#allocation4 + $0x330] sm:$0xff]
        %v382 = vld [vmem:[#allocation4 + $0x338] sm:$0xff]
        %v383 = vld [vmem:[#allocation4 + $0x340] sm:$0xff]
        %v384 = vld [vmem:[#allocation4 + $0x348] sm:$0xff]
        %v385 = vld [vmem:[#allocation4 + $0x350] sm:$0xff]
        %v386 = vld [vmem:[#allocation4 + $0x358] sm:$0xff]
        %v387 = vld [vmem:[#allocation4 + $0x360] sm:$0xff]
        %v388 = vld [vmem:[#allocation4 + $0x368] sm:$0xff]
        %v389 = vld [vmem:[#allocation4 + $0x370] sm:$0xff]
        %v390 = vld [vmem:[#allocation4 + $0x378] sm:$0xff]
        %v391 = vld [vmem:[%s2] sm:$0x1]
        %v393 = vperm.slane %v391, 0
        %395 = vmatpush.msra.mxu0 %v294
        %396 = vmatpush.msra.mxu0 %v293
        %397 = vmatpush.msra.mxu0 %v292
        %398 = vmatpush.msra.mxu0 %v291
        %399 = vmatpush.msra.mxu0 %v290
        %400 = vmatpush.msra.mxu0 %v289
        %401 = vmatpush.msra.mxu0 %v288
        %402 = vmatpush.msra.mxu0 %v287
        %403 = vmatpush.msra.mxu0 %v286
        %404 = vmatpush.msra.mxu0 %v285
        %405 = vmatpush.msra.mxu0 %v284
        %406 = vmatpush.msra.mxu0 %v283
        %407 = vmatpush.msra.mxu0 %v282
        %408 = vmatpush.msra.mxu0 %v281
        %409 = vmatpush.msra.mxu0 %v280
        %410 = vmatpush.msra.mxu0 %v279
        %411 = vmatmul.f32.gmra.mxu0 %v265
        %v412 = vpop.f32.mrf.mxu0
        %v413 = vadd.f32 %v393, %v412
        %414 = vmatmul.f32.gmra.mxu0 %v266
        %v415 = vpop.f32.mrf.mxu0
        %v416 = vadd.f32 %v393, %v415
        %417 = vdwg.mxu0
        %418 = vmatpush.msra.mxu0 %v310
        %419 = vmatpush.msra.mxu0 %v309
        %420 = vmatpush.msra.mxu0 %v308
        %421 = vmatpush.msra.mxu0 %v307
        %422 = vmatpush.msra.mxu0 %v306
        %423 = vmatpush.msra.mxu0 %v305
        %424 = vmatpush.msra.mxu0 %v304
        %425 = vmatpush.msra.mxu0 %v303
        %426 = vmatpush.msra.mxu0 %v302
        %427 = vmatpush.msra.mxu0 %v301
        %428 = vmatpush.msra.mxu0 %v300
        %429 = vmatpush.msra.mxu0 %v299
        %430 = vmatpush.msra.mxu0 %v298
        %431 = vmatpush.msra.mxu0 %v297
        %432 = vmatpush.msra.mxu0 %v296
        %433 = vmatpush.msra.mxu0 %v295
        %434 = vmatmul.f32.gmra.mxu0 %v267
        %v435 = vpop.f32.mrf.mxu0
        %v436 = vadd.f32 %v413, %v435
        %437 = vmatmul.f32.gmra.mxu0 %v268
        %v438 = vpop.f32.mrf.mxu0
        %v439 = vadd.f32 %v416, %v438
        %440 = vdwg.mxu0
        %441 = vmatpush.msra.mxu0 %v326
        %442 = vmatpush.msra.mxu0 %v325
        %443 = vmatpush.msra.mxu0 %v324
        %444 = vmatpush.msra.mxu0 %v323
        %445 = vmatpush.msra.mxu0 %v322
        %446 = vmatpush.msra.mxu0 %v321
        %447 = vmatpush.msra.mxu0 %v320
        %448 = vmatpush.msra.mxu0 %v319
        %449 = vmatpush.msra.mxu0 %v318
        %450 = vmatpush.msra.mxu0 %v317
        %451 = vmatpush.msra.mxu0 %v316
        %452 = vmatpush.msra.mxu0 %v315
        %453 = vmatpush.msra.mxu0 %v314
        %454 = vmatpush.msra.mxu0 %v313
        %455 = vmatpush.msra.mxu0 %v312
        %456 = vmatpush.msra.mxu0 %v311
        %457 = vmatmul.f32.gmra.mxu0 %v269
        %v458 = vpop.f32.mrf.mxu0
        %v459 = vadd.f32 %v436, %v458
        %460 = vmatmul.f32.gmra.mxu0 %v270
        %v461 = vpop.f32.mrf.mxu0
        %v462 = vadd.f32 %v439, %v461
        %463 = vdwg.mxu0
        %464 = vmatpush.msra.mxu0 %v342
        %465 = vmatpush.msra.mxu0 %v341
        %466 = vmatpush.msra.mxu0 %v340
        %467 = vmatpush.msra.mxu0 %v339
        %468 = vmatpush.msra.mxu0 %v338
        %469 = vmatpush.msra.mxu0 %v337
        %470 = vmatpush.msra.mxu0 %v336
        %471 = vmatpush.msra.mxu0 %v335
        %472 = vmatpush.msra.mxu0 %v334
        %473 = vmatpush.msra.mxu0 %v333
        %474 = vmatpush.msra.mxu0 %v332
        %475 = vmatpush.msra.mxu0 %v331
        %476 = vmatpush.msra.mxu0 %v330
        %477 = vmatpush.msra.mxu0 %v329
        %478 = vmatpush.msra.mxu0 %v328
        %479 = vmatpush.msra.mxu0 %v327
        %480 = vmatmul.f32.gmra.mxu0 %v271
        %v481 = vpop.f32.mrf.mxu0
        %v482 = vadd.f32 %v459, %v481
        %483 = vmatmul.f32.gmra.mxu0 %v272
        %v484 = vpop.f32.mrf.mxu0
        %v485 = vadd.f32 %v462, %v484
        %486 = vdwg.mxu0
        %487 = vmatpush.msra.mxu0 %v358
        %488 = vmatpush.msra.mxu0 %v357
        %489 = vmatpush.msra.mxu0 %v356
        %490 = vmatpush.msra.mxu0 %v355
        %491 = vmatpush.msra.mxu0 %v354
        %492 = vmatpush.msra.mxu0 %v353
        %493 = vmatpush.msra.mxu0 %v352
        %494 = vmatpush.msra.mxu0 %v351
        %495 = vmatpush.msra.mxu0 %v350
        %496 = vmatpush.msra.mxu0 %v349
        %497 = vmatpush.msra.mxu0 %v348
        %498 = vmatpush.msra.mxu0 %v347
        %499 = vmatpush.msra.mxu0 %v346
        %500 = vmatpush.msra.mxu0 %v345
        %501 = vmatpush.msra.mxu0 %v344
        %502 = vmatpush.msra.mxu0 %v343
        %503 = vmatmul.f32.gmra.mxu0 %v273
        %v504 = vpop.f32.mrf.mxu0
        %v505 = vadd.f32 %v482, %v504
        %506 = vmatmul.f32.gmra.mxu0 %v274
        %v507 = vpop.f32.mrf.mxu0
        %v508 = vadd.f32 %v485, %v507
        %509 = vdwg.mxu0
        %510 = vmatpush.msra.mxu0 %v374
        %511 = vmatpush.msra.mxu0 %v373
        %512 = vmatpush.msra.mxu0 %v372
        %513 = vmatpush.msra.mxu0 %v371
        %514 = vmatpush.msra.mxu0 %v370
        %515 = vmatpush.msra.mxu0 %v369
        %516 = vmatpush.msra.mxu0 %v368
        %517 = vmatpush.msra.mxu0 %v367
        %518 = vmatpush.msra.mxu0 %v366
        %519 = vmatpush.msra.mxu0 %v365
        %520 = vmatpush.msra.mxu0 %v364
        %521 = vmatpush.msra.mxu0 %v363
        %522 = vmatpush.msra.mxu0 %v362
        %523 = vmatpush.msra.mxu0 %v361
        %524 = vmatpush.msra.mxu0 %v360
        %525 = vmatpush.msra.mxu0 %v359
        %526 = vmatmul.f32.gmra.mxu0 %v275
        %v527 = vpop.f32.mrf.mxu0
        %v528 = vadd.f32 %v505, %v527
        %529 = vmatmul.f32.gmra.mxu0 %v276
        %v530 = vpop.f32.mrf.mxu0
        %v531 = vadd.f32 %v508, %v530
        %532 = vdwg.mxu0
        %533 = vmatpush.msra.mxu0 %v390
        %534 = vmatpush.msra.mxu0 %v389
        %535 = vmatpush.msra.mxu0 %v388
        %536 = vmatpush.msra.mxu0 %v387
        %537 = vmatpush.msra.mxu0 %v386
        %538 = vmatpush.msra.mxu0 %v385
        %539 = vmatpush.msra.mxu0 %v384
        %540 = vmatpush.msra.mxu0 %v383
        %541 = vmatpush.msra.mxu0 %v382
        %542 = vmatpush.msra.mxu0 %v381
        %543 = vmatpush.msra.mxu0 %v380
        %544 = vmatpush.msra.mxu0 %v379
        %545 = vmatpush.msra.mxu0 %v378
        %546 = vmatpush.msra.mxu0 %v377
        %547 = vmatpush.msra.mxu0 %v376
        %548 = vmatpush.msra.mxu0 %v375
        %549 = vmatmul.f32.gmra.mxu0 %v277
        %v550 = vpop.f32.mrf.mxu0
        %v551 = vadd.f32 %v528, %v550
        %552 = vmatmul.f32.gmra.mxu0 %v278
        %v553 = vpop.f32.mrf.mxu0
        %v554 = vadd.f32 %v531, %v553
        %555 = vdwg.mxu0
        %v556 = vmax.f32 %v551, 0.0
        %v557 = vmax.f32 %v554, 0.0
        %558 = vst [vmem:[#allocation3] sm:$0x7] 0.0
        %559 = vst [vmem:[#allocation3 + $0x13] sm:$0x7] 0.0
        %560 = vst [vmem:[#allocation3 + $0x3] sm:$0xff] %v556
        %561 = vst [vmem:[#allocation3 + $0xb] sm:$0xff] %v557
        %v562 = vld [vmem:[#allocation3] sm:$0xff]
        %v563 = vld [vmem:[#allocation3 + $0x8] sm:$0xff]
        %v564 = vld [vmem:[#allocation3 + $0x1] sm:$0xff]
        %v565 = vld [vmem:[#allocation3 + $0x9] sm:$0xff]
        %v566 = vld [vmem:[#allocation3 + $0x2] sm:$0xff]
        %v567 = vld [vmem:[#allocation3 + $0xa] sm:$0xff]
        %v568 = vld [vmem:[#allocation3 + $0x3] sm:$0xff]
        %v569 = vld [vmem:[#allocation3 + $0xb] sm:$0xff]
        %v570 = vld [vmem:[#allocation3 + $0x4] sm:$0xff]
        %v571 = vld [vmem:[#allocation3 + $0xc] sm:$0xff]
        %v572 = vld [vmem:[#allocation3 + $0x5] sm:$0xff]
        %v573 = vld [vmem:[#allocation3 + $0xd] sm:$0xff]
        %v574 = vld [vmem:[#allocation3 + $0x6] sm:$0xff]
        %v575 = vld [vmem:[#allocation3 + $0xe] sm:$0xff]
        %v576 = vld [vmem:[#allocation6] sm:$0xff]
        %v577 = vld [vmem:[#allocation6 + $0x8] sm:$0xff]
        %v578 = vld [vmem:[#allocation6 + $0x10] sm:$0xff]
        %v579 = vld [vmem:[#allocation6 + $0x18] sm:$0xff]
        %v580 = vld [vmem:[#allocation6 + $0x20] sm:$0xff]
        %v581 = vld [vmem:[#allocation6 + $0x28] sm:$0xff]
        %v582 = vld [vmem:[#allocation6 + $0x30] sm:$0xff]
        %v583 = vld [vmem:[#allocation6 + $0x38] sm:$0xff]
        %v584 = vld [vmem:[#allocation6 + $0x40] sm:$0xff]
        %v585 = vld [vmem:[#allocation6 + $0x48] sm:$0xff]
        %v586 = vld [vmem:[#allocation6 + $0x50] sm:$0xff]
        %v587 = vld [vmem:[#allocation6 + $0x58] sm:$0xff]
        %v588 = vld [vmem:[#allocation6 + $0x60] sm:$0xff]
        %v589 = vld [vmem:[#allocation6 + $0x68] sm:$0xff]
        %v590 = vld [vmem:[#allocation6 + $0x70] sm:$0xff]
        %v591 = vld [vmem:[#allocation6 + $0x78] sm:$0xff]
        %v592 = vld [vmem:[#allocation6 + $0x80] sm:$0xff]
        %v593 = vld [vmem:[#allocation6 + $0x88] sm:$0xff]
        %v594 = vld [vmem:[#allocation6 + $0x90] sm:$0xff]
        %v595 = vld [vmem:[#allocation6 + $0x98] sm:$0xff]
        %v596 = vld [vmem:[#allocation6 + $0xa0] sm:$0xff]
        %v597 = vld [vmem:[#allocation6 + $0xa8] sm:$0xff]
        %v598 = vld [vmem:[#allocation6 + $0xb0] sm:$0xff]
        %v599 = vld [vmem:[#allocation6 + $0xb8] sm:$0xff]
        %v600 = vld [vmem:[#allocation6 + $0xc0] sm:$0xff]
        %v601 = vld [vmem:[#allocation6 + $0xc8] sm:$0xff]
        %v602 = vld [vmem:[#allocation6 + $0xd0] sm:$0xff]
        %v603 = vld [vmem:[#allocation6 + $0xd8] sm:$0xff]
        %v604 = vld [vmem:[#allocation6 + $0xe0] sm:$0xff]
        %v605 = vld [vmem:[#allocation6 + $0xe8] sm:$0xff]
        %v606 = vld [vmem:[#allocation6 + $0xf0] sm:$0xff]
        %v607 = vld [vmem:[#allocation6 + $0xf8] sm:$0xff]
        %v608 = vld [vmem:[#allocation6 + $0x100] sm:$0xff]
        %v609 = vld [vmem:[#allocation6 + $0x108] sm:$0xff]
        %v610 = vld [vmem:[#allocation6 + $0x110] sm:$0xff]
        %v611 = vld [vmem:[#allocation6 + $0x118] sm:$0xff]
        %v612 = vld [vmem:[#allocation6 + $0x120] sm:$0xff]
        %v613 = vld [vmem:[#allocation6 + $0x128] sm:$0xff]
        %v614 = vld [vmem:[#allocation6 + $0x130] sm:$0xff]
        %v615 = vld [vmem:[#allocation6 + $0x138] sm:$0xff]
        %v616 = vld [vmem:[#allocation6 + $0x140] sm:$0xff]
        %v617 = vld [vmem:[#allocation6 + $0x148] sm:$0xff]
        %v618 = vld [vmem:[#allocation6 + $0x150] sm:$0xff]
        %v619 = vld [vmem:[#allocation6 + $0x158] sm:$0xff]
        %v620 = vld [vmem:[#allocation6 + $0x160] sm:$0xff]
        %v621 = vld [vmem:[#allocation6 + $0x168] sm:$0xff]
        %v622 = vld [vmem:[#allocation6 + $0x170] sm:$0xff]
        %v623 = vld [vmem:[#allocation6 + $0x178] sm:$0xff]
        %v624 = vld [vmem:[#allocation6 + $0x180] sm:$0xff]
        %v625 = vld [vmem:[#allocation6 + $0x188] sm:$0xff]
        %v626 = vld [vmem:[#allocation6 + $0x190] sm:$0xff]
        %v627 = vld [vmem:[#allocation6 + $0x198] sm:$0xff]
        %v628 = vld [vmem:[#allocation6 + $0x1a0] sm:$0xff]
        %v629 = vld [vmem:[#allocation6 + $0x1a8] sm:$0xff]
        %v630 = vld [vmem:[#allocation6 + $0x1b0] sm:$0xff]
        %v631 = vld [vmem:[#allocation6 + $0x1b8] sm:$0xff]
        %v632 = vld [vmem:[#allocation6 + $0x1c0] sm:$0xff]
        %v633 = vld [vmem:[#allocation6 + $0x1c8] sm:$0xff]
        %v634 = vld [vmem:[#allocation6 + $0x1d0] sm:$0xff]
        %v635 = vld [vmem:[#allocation6 + $0x1d8] sm:$0xff]
        %v636 = vld [vmem:[#allocation6 + $0x1e0] sm:$0xff]
        %v637 = vld [vmem:[#allocation6 + $0x1e8] sm:$0xff]
        %v638 = vld [vmem:[#allocation6 + $0x1f0] sm:$0xff]
        %v639 = vld [vmem:[#allocation6 + $0x1f8] sm:$0xff]
        %v640 = vld [vmem:[#allocation6 + $0x200] sm:$0xff]
        %v641 = vld [vmem:[#allocation6 + $0x208] sm:$0xff]
        %v642 = vld [vmem:[#allocation6 + $0x210] sm:$0xff]
        %v643 = vld [vmem:[#allocation6 + $0x218] sm:$0xff]
        %v644 = vld [vmem:[#allocation6 + $0x220] sm:$0xff]
        %v645 = vld [vmem:[#allocation6 + $0x228] sm:$0xff]
        %v646 = vld [vmem:[#allocation6 + $0x230] sm:$0xff]
        %v647 = vld [vmem:[#allocation6 + $0x238] sm:$0xff]
        %v648 = vld [vmem:[#allocation6 + $0x240] sm:$0xff]
        %v649 = vld [vmem:[#allocation6 + $0x248] sm:$0xff]
        %v650 = vld [vmem:[#allocation6 + $0x250] sm:$0xff]
        %v651 = vld [vmem:[#allocation6 + $0x258] sm:$0xff]
        %v652 = vld [vmem:[#allocation6 + $0x260] sm:$0xff]
        %v653 = vld [vmem:[#allocation6 + $0x268] sm:$0xff]
        %v654 = vld [vmem:[#allocation6 + $0x270] sm:$0xff]
        %v655 = vld [vmem:[#allocation6 + $0x278] sm:$0xff]
        %v656 = vld [vmem:[#allocation6 + $0x280] sm:$0xff]
        %v657 = vld [vmem:[#allocation6 + $0x288] sm:$0xff]
        %v658 = vld [vmem:[#allocation6 + $0x290] sm:$0xff]
        %v659 = vld [vmem:[#allocation6 + $0x298] sm:$0xff]
        %v660 = vld [vmem:[#allocation6 + $0x2a0] sm:$0xff]
        %v661 = vld [vmem:[#allocation6 + $0x2a8] sm:$0xff]
        %v662 = vld [vmem:[#allocation6 + $0x2b0] sm:$0xff]
        %v663 = vld [vmem:[#allocation6 + $0x2b8] sm:$0xff]
        %v664 = vld [vmem:[#allocation6 + $0x2c0] sm:$0xff]
        %v665 = vld [vmem:[#allocation6 + $0x2c8] sm:$0xff]
        %v666 = vld [vmem:[#allocation6 + $0x2d0] sm:$0xff]
        %v667 = vld [vmem:[#allocation6 + $0x2d8] sm:$0xff]
        %v668 = vld [vmem:[#allocation6 + $0x2e0] sm:$0xff]
        %v669 = vld [vmem:[#allocation6 + $0x2e8] sm:$0xff]
        %v670 = vld [vmem:[#allocation6 + $0x2f0] sm:$0xff]
        %v671 = vld [vmem:[#allocation6 + $0x2f8] sm:$0xff]
        %v672 = vld [vmem:[#allocation6 + $0x300] sm:$0xff]
        %v673 = vld [vmem:[#allocation6 + $0x308] sm:$0xff]
        %v674 = vld [vmem:[#allocation6 + $0x310] sm:$0xff]
        %v675 = vld [vmem:[#allocation6 + $0x318] sm:$0xff]
        %v676 = vld [vmem:[#allocation6 + $0x320] sm:$0xff]
        %v677 = vld [vmem:[#allocation6 + $0x328] sm:$0xff]
        %v678 = vld [vmem:[#allocation6 + $0x330] sm:$0xff]
        %v679 = vld [vmem:[#allocation6 + $0x338] sm:$0xff]
        %v680 = vld [vmem:[#allocation6 + $0x340] sm:$0xff]
        %v681 = vld [vmem:[#allocation6 + $0x348] sm:$0xff]
        %v682 = vld [vmem:[#allocation6 + $0x350] sm:$0xff]
        %v683 = vld [vmem:[#allocation6 + $0x358] sm:$0xff]
        %v684 = vld [vmem:[#allocation6 + $0x360] sm:$0xff]
        %v685 = vld [vmem:[#allocation6 + $0x368] sm:$0xff]
        %v686 = vld [vmem:[#allocation6 + $0x370] sm:$0xff]
        %v687 = vld [vmem:[#allocation6 + $0x378] sm:$0xff]
        %v688 = vld [vmem:[%s4] sm:$0x1]
        %v690 = vperm.slane %v688, 0
        %692 = vmatpush.msra.mxu0 %v591
        %693 = vmatpush.msra.mxu0 %v590
        %694 = vmatpush.msra.mxu0 %v589
        %695 = vmatpush.msra.mxu0 %v588
        %696 = vmatpush.msra.mxu0 %v587
        %697 = vmatpush.msra.mxu0 %v586
        %698 = vmatpush.msra.mxu0 %v585
        %699 = vmatpush.msra.mxu0 %v584
        %700 = vmatpush.msra.mxu0 %v583
        %701 = vmatpush.msra.mxu0 %v582
        %702 = vmatpush.msra.mxu0 %v581
        %703 = vmatpush.msra.mxu0 %v580
        %704 = vmatpush.msra.mxu0 %v579
        %705 = vmatpush.msra.mxu0 %v578
        %706 = vmatpush.msra.mxu0 %v577
        %707 = vmatpush.msra.mxu0 %v576
        %708 = vmatmul.f32.gmra.mxu0 %v562
        %v709 = vpop.f32.mrf.mxu0
        %v710 = vadd.f32 %v690, %v709
        %711 = vmatmul.f32.gmra.mxu0 %v563
        %v712 = vpop.f32.mrf.mxu0
        %v713 = vadd.f32 %v690, %v712
        %714 = vdwg.mxu0
        %715 = vmatpush.msra.mxu0 %v607
        %716 = vmatpush.msra.mxu0 %v606
        %717 = vmatpush.msra.mxu0 %v605
        %718 = vmatpush.msra.mxu0 %v604
        %719 = vmatpush.msra.mxu0 %v603
        %720 = vmatpush.msra.mxu0 %v602
        %721 = vmatpush.msra.mxu0 %v601
        %722 = vmatpush.msra.mxu0 %v600
        %723 = vmatpush.msra.mxu0 %v599
        %724 = vmatpush.msra.mxu0 %v598
        %725 = vmatpush.msra.mxu0 %v597
        %726 = vmatpush.msra.mxu0 %v596
        %727 = vmatpush.msra.mxu0 %v595
        %728 = vmatpush.msra.mxu0 %v594
        %729 = vmatpush.msra.mxu0 %v593
        %730 = vmatpush.msra.mxu0 %v592
        %731 = vmatmul.f32.gmra.mxu0 %v564
        %v732 = vpop.f32.mrf.mxu0
        %v733 = vadd.f32 %v710, %v732
        %734 = vmatmul.f32.gmra.mxu0 %v565
        %v735 = vpop.f32.mrf.mxu0
        %v736 = vadd.f32 %v713, %v735
        %737 = vdwg.mxu0
        %738 = vmatpush.msra.mxu0 %v623
        %739 = vmatpush.msra.mxu0 %v622
        %740 = vmatpush.msra.mxu0 %v621
        %741 = vmatpush.msra.mxu0 %v620
        %742 = vmatpush.msra.mxu0 %v619
        %743 = vmatpush.msra.mxu0 %v618
        %744 = vmatpush.msra.mxu0 %v617
        %745 = vmatpush.msra.mxu0 %v616
        %746 = vmatpush.msra.mxu0 %v615
        %747 = vmatpush.msra.mxu0 %v614
        %748 = vmatpush.msra.mxu0 %v613
        %749 = vmatpush.msra.mxu0 %v612
        %750 = vmatpush.msra.mxu0 %v611
        %751 = vmatpush.msra.mxu0 %v610
        %752 = vmatpush.msra.mxu0 %v609
        %753 = vmatpush.msra.mxu0 %v608
        %754 = vmatmul.f32.gmra.mxu0 %v566
        %v755 = vpop.f32.mrf.mxu0
        %v756 = vadd.f32 %v733, %v755
        %757 = vmatmul.f32.gmra.mxu0 %v567
        %v758 = vpop.f32.mrf.mxu0
        %v759 = vadd.f32 %v736, %v758
        %760 = vdwg.mxu0
        %761 = vmatpush.msra.mxu0 %v639
        %762 = vmatpush.msra.mxu0 %v638
        %763 = vmatpush.msra.mxu0 %v637
        %764 = vmatpush.msra.mxu0 %v636
        %765 = vmatpush.msra.mxu0 %v635
        %766 = vmatpush.msra.mxu0 %v634
        %767 = vmatpush.msra.mxu0 %v633
        %768 = vmatpush.msra.mxu0 %v632
        %769 = vmatpush.msra.mxu0 %v631
        %770 = vmatpush.msra.mxu0 %v630
        %771 = vmatpush.msra.mxu0 %v629
        %772 = vmatpush.msra.mxu0 %v628
        %773 = vmatpush.msra.mxu0 %v627
        %774 = vmatpush.msra.mxu0 %v626
        %775 = vmatpush.msra.mxu0 %v625
        %776 = vmatpush.msra.mxu0 %v624
        %777 = vmatmul.f32.gmra.mxu0 %v568
        %v778 = vpop.f32.mrf.mxu0
        %v779 = vadd.f32 %v756, %v778
        %780 = vmatmul.f32.gmra.mxu0 %v569
        %v781 = vpop.f32.mrf.mxu0
        %v782 = vadd.f32 %v759, %v781
        %783 = vdwg.mxu0
        %784 = vmatpush.msra.mxu0 %v655
        %785 = vmatpush.msra.mxu0 %v654
        %786 = vmatpush.msra.mxu0 %v653
        %787 = vmatpush.msra.mxu0 %v652
        %788 = vmatpush.msra.mxu0 %v651
        %789 = vmatpush.msra.mxu0 %v650
        %790 = vmatpush.msra.mxu0 %v649
        %791 = vmatpush.msra.mxu0 %v648
        %792 = vmatpush.msra.mxu0 %v647
        %793 = vmatpush.msra.mxu0 %v646
        %794 = vmatpush.msra.mxu0 %v645
        %795 = vmatpush.msra.mxu0 %v644
        %796 = vmatpush.msra.mxu0 %v643
        %797 = vmatpush.msra.mxu0 %v642
        %798 = vmatpush.msra.mxu0 %v641
        %799 = vmatpush.msra.mxu0 %v640
        %800 = vmatmul.f32.gmra.mxu0 %v570
        %v801 = vpop.f32.mrf.mxu0
        %v802 = vadd.f32 %v779, %v801
        %803 = vmatmul.f32.gmra.mxu0 %v571
        %v804 = vpop.f32.mrf.mxu0
        %v805 = vadd.f32 %v782, %v804
        %806 = vdwg.mxu0
        %807 = vmatpush.msra.mxu0 %v671
        %808 = vmatpush.msra.mxu0 %v670
        %809 = vmatpush.msra.mxu0 %v669
        %810 = vmatpush.msra.mxu0 %v668
        %811 = vmatpush.msra.mxu0 %v667
        %812 = vmatpush.msra.mxu0 %v666
        %813 = vmatpush.msra.mxu0 %v665
        %814 = vmatpush.msra.mxu0 %v664
        %815 = vmatpush.msra.mxu0 %v663
        %816 = vmatpush.msra.mxu0 %v662
        %817 = vmatpush.msra.mxu0 %v661
        %818 = vmatpush.msra.mxu0 %v660
        %819 = vmatpush.msra.mxu0 %v659
        %820 = vmatpush.msra.mxu0 %v658
        %821 = vmatpush.msra.mxu0 %v657
        %822 = vmatpush.msra.mxu0 %v656
        %823 = vmatmul.f32.gmra.mxu0 %v572
        %v824 = vpop.f32.mrf.mxu0
        %v825 = vadd.f32 %v802, %v824
        %826 = vmatmul.f32.gmra.mxu0 %v573
        %v827 = vpop.f32.mrf.mxu0
        %v828 = vadd.f32 %v805, %v827
        %829 = vdwg.mxu0
        %830 = vmatpush.msra.mxu0 %v687
        %831 = vmatpush.msra.mxu0 %v686
        %832 = vmatpush.msra.mxu0 %v685
        %833 = vmatpush.msra.mxu0 %v684
        %834 = vmatpush.msra.mxu0 %v683
        %835 = vmatpush.msra.mxu0 %v682
        %836 = vmatpush.msra.mxu0 %v681
        %837 = vmatpush.msra.mxu0 %v680
        %838 = vmatpush.msra.mxu0 %v679
        %839 = vmatpush.msra.mxu0 %v678
        %840 = vmatpush.msra.mxu0 %v677
        %841 = vmatpush.msra.mxu0 %v676
        %842 = vmatpush.msra.mxu0 %v675
        %843 = vmatpush.msra.mxu0 %v674
        %844 = vmatpush.msra.mxu0 %v673
        %845 = vmatpush.msra.mxu0 %v672
        %846 = vmatmul.f32.gmra.mxu0 %v574
        %v847 = vpop.f32.mrf.mxu0
        %v848 = vadd.f32 %v825, %v847
        %849 = vmatmul.f32.gmra.mxu0 %v575
        %v850 = vpop.f32.mrf.mxu0
        %v851 = vadd.f32 %v828, %v850
        %852 = vdwg.mxu0
        %v853 = vxor.u32 %v848, 2147483648
        %v854 = vxor.u32 %v851, 2147483648
        %v855 = vmul.f32 %v853, 1.442695
        %v856 = vpow.pop %v855
        %v857 = vmul.f32 %v854, 1.442695
        %v858 = vpow.pop %v857
        %v859 = vadd.f32 %v856, 1.0
        %v860 = vadd.f32 %v858, 1.0
        %v861 = vrcp.pop %v859
        %v862 = vmul.f32 %v859, %v861
        %v863 = vsub.f32 1.0, %v862
        %v864 = vmul.f32 %v861, %v863
        %v865 = vadd.f32 %v861, %v864
        %vm866 = vweird.f32 %v859
        %vm867 = vweird.f32 %v861
        %vm868 = vmor %vm866, %vm867
        %v869 = vsel %vm868, %v861, %v865
        %v870 = vand.u32 2147483647, %v859
        %vm871 = vcmp.eq.f32.partialorder %v870, 8.507059e+37
        %v872 = vand.u32 %v859, 2147483648
        %v873 = vor.u32 1.1754944e-38, %v872
        %v874 = vsel %vm871, %v873, %v869
        %v875 = vmul.f32 1.0, %v874
        %v876 = vrcp.pop %v860
        %v877 = vmul.f32 %v860, %v876
        %v878 = vsub.f32 1.0, %v877
        %v879 = vmul.f32 %v876, %v878
        %v880 = vadd.f32 %v876, %v879
        %vm881 = vweird.f32 %v860
        %vm882 = vweird.f32 %v876
        %vm883 = vmor %vm881, %vm882
        %v884 = vsel %vm883, %v876, %v880
        %v885 = vand.u32 2147483647, %v860
        %vm886 = vcmp.eq.f32.partialorder %v885, 8.507059e+37
        %v887 = vand.u32 %v860, 2147483648
        %v888 = vor.u32 1.1754944e-38, %v887
        %v889 = vsel %vm886, %v888, %v884
        %v890 = vmul.f32 1.0, %v889
        %v891 = vmul.f32 %v259, %v875
        %v892 = vmul.f32 %v260, %v890
        %893 = vst [vmem:[%s258] sm:$0xff] %v891
        %894 = vst [vmem:[%s258 + $0x8] sm:$0xff] %v892
        %p895 = scmp.lt.s32.totalorder %s18, 1
        %s896 = scalar_select %p895, %s18, 1
        %s897 = smul.addr %s896, 2
        %s898 = smul.addr %s897, 8
        %s899 = scalar_lea.vmem %s5, %s898
        // Predicated region
        $region49: #{spa_cnn_forward.1} parent=39 // pred_check
          %p900 = pneg %p146
        $region50: #{spa_cnn_forward.1} parent=39 // pred_check_branch
          %902 = sbr.rel (%p900) target = $region52
        $region51: #{spa_cnn_forward.1} parent=39 // pred_region
          _
        $region52: #{spa_cnn_forward.1} parent=39 // pred_fallthru
          _
      $region40: #{spa_cnn_forward.1} parent=5 // pred_fallthru
        _
      %p903 = scmp.le.s32.totalorder 2, %s13
      // Predicated region
      $region53: #{spa_cnn_forward.1} parent=5 // pred_check
        %p904 = pneg %p903
      $region54: #{spa_cnn_forward.1} parent=5 // pred_check_branch
        %906 = sbr.rel (%p904) target = $region56
      $region55: #{spa_cnn_forward.1} parent=5 // pred_region
        %s907 = ssub.s32 %s13, 2
        // Predicated region
        $region57: #{spa_cnn_forward.1} parent=55 // pred_check
          %p908 = pneg %p152
        $region58: #{spa_cnn_forward.1} parent=55 // pred_check_branch
          %910 = sbr.rel (%p908) target = $region60
        $region59: #{spa_cnn_forward.1} parent=55 // pred_region
          %p911 = scmp.lt.s32.totalorder %s19, 1
          %s912 = scalar_select %p911, %s19, 1
          %s913 = smul.addr %s912, 2
          %s914 = smul.addr %s913, 8
          %s915 = scalar_lea.vmem %s5, %s914
        $region60: #{spa_cnn_forward.1} parent=55 // pred_fallthru
          _
      $region56: #{spa_cnn_forward.1} parent=5 // pred_fallthru
        _
    $region6: #{spa_cnn_forward.1} parent=1 // loop_footer
      %s17 = sadd.s32 1, %s13
    $region7: #{spa_cnn_forward.1} parent=1 // loop_footer_branch
      %12 = sbr.rel target = $region3
    $region8: #{spa_cnn_forward.1} parent=1 // loop_exit
      _
    %916 = vsyncpa [#allocation5], 1
    %s917 = scalar_lea.sflag [#allocation5], 1
    %918 = vsyncpa %s917, 1
    %919 = vsyncpa [#allocation7], 1

</llo_original>
